<compile_context>
chip_gen: v6e
topology: v6e:2x2x1
jax: 0.10.0
libtpu: 0.0.40
codegen_flags: <defaults>
</compile_context>

<pallas_src>
import functools

import jax
import jax.numpy as jnp
from jax.experimental import pallas as pl
from jax.experimental.pallas import tpu as pltpu


# ----------------------------- plain-JAX glue -------------------------------

def conv1x1_prelu(x, w, b, a):
    """BasicBlock(1x1 conv + PReLU).  x: (N, C_in, H, W) NCHW."""
    y = jnp.einsum("oc,nchw->nohw", w, x, precision=jax.lax.Precision.HIGHEST)
    y = y + b[None, :, None, None]
    return jnp.where(y >= 0, y, a * y)


def extract_patches_cm(x, K=3):
    """torch.nn.Unfold (same pad, stride 1) -> (N, C*K*K, H*W), D ordered (c,kh,kw)."""
    N, C, H, W = x.shape
    p = K // 2
    xp = jnp.pad(x, ((0, 0), (0, 0), (p, p), (p, p)))
    cols = [xp[:, :, kh:kh + H, kw:kw + W] for kh in range(K) for kw in range(K)]
    P = jnp.stack(cols, axis=2)                       # (N, C, K*K, H, W)
    return P.reshape(N, C * K * K, H * W)


def extract_patches_5d(x, K=3):
    """torch.nn.Unfold (same pad, stride 1) reshaped to (N, H*W, C, K, K)."""
    N, C, H, W = x.shape
    p = K // 2
    xp = jnp.pad(x, ((0, 0), (0, 0), (p, p), (p, p)))
    cols = [xp[:, :, kh:kh + H, kw:kw + W] for kh in range(K) for kw in range(K)]
    P = jnp.stack(cols, axis=0).reshape(K, K, N, C, H, W)
    P = P.transpose(2, 4, 5, 3, 0, 1)                 # (N, H, W, C, K, K)
    return P.reshape(N, H * W, C, K, K)


# ------------------------------ Pallas kernel -------------------------------

def _pa_kernel(qT_ref, wk_ref, v_ref, mask_ref, res_ref, out_ref, *,
               offsets, L_l, C, softmax_scale, res_scale, escape_nan):
    wk = wk_ref[...]                                  # (L_s, D)  f32 raw key patches
    qT = qT_ref[...]                                  # (D, L_l)  f32 query patches^T

    # Key L2-normalisation deferred to a per-key row scale applied AFTER the
    # matmul (MXU starts immediately); the reciprocal runs off the VALU path.
    ss = jnp.sum(wk * wk, axis=1, keepdims=True)      # (L_s, 1)
    row_scale = softmax_scale * pl.reciprocal(jnp.sqrt(ss) + escape_nan,
                                              approx=False)

    # Scores in transposed layout: S^T = WK @ Q^T -> (L_s, L_l); lane axis = L_l.
    s = jnp.dot(wk, qT, preferred_element_type=jnp.float32) * row_scale

    # Softmax over key positions (axis 0); denominator via EUP approx reciprocal.
    s = s - jnp.max(s, axis=0, keepdims=True)
    e = jnp.exp(s)
    a = e * pl.reciprocal(jnp.sum(e, axis=0, keepdims=True), approx=True)

    # One wide matmul for all K*K conv_transpose taps:
    #   (K*K*C, L_s) @ (L_s, L_l) -> (K*K*C, L_l); bf16 operands, f32 accumulate.
    prod = jnp.dot(v_ref[...], a.astype(v_ref.dtype),
                   preferred_element_type=jnp.float32)

    # conv_transpose2d(stride=1, padding=1)/4 as per-tap lane-roll + mask
    # (mask already carries the 0.25 normaliser).  The wrap-around roll is safe
    # only because, for ksize=3 / padding=1, the mask zeroes exactly the
    # wrapped positions (guaranteed by construction in the wrapper).
    mask = mask_ref[...]                              # (K*K, L_l) f32, lane-dense
    acc = jnp.zeros(out_ref.shape, jnp.float32)       # (C, L_l)
    for tap, off in enumerate(offsets):
        m = prod[tap * C:(tap + 1) * C, :]            # (C, L_l), aligned 8-row slice
        if off != 0:
            m = pltpu.roll(m, shift=(-off) % L_l, axis=1)
        acc = acc + m * mask[tap:tap + 1, :]

    res = res_ref[...]
    if res_scale != 1.0:
        res = res * res_scale
    out_ref[...] = acc + res


# ------------------------------ wrapper --------------------------------------

def pyramid_attention_forward(input_l, input_s, params, *, ksize=3,
                              softmax_scale=10.0, res_scale=1.0,
                              value_dtype=jnp.bfloat16):
    N, C, H_l, W_l = input_l.shape
    _, _, H_s, W_s = input_s.shape
    K = ksize
    assert K == 3, "roll/mask conv_transpose path is derived for ksize=3, padding=1"
    L_l, L_s = H_l * W_l, H_s * W_s

    # 1x1 conv + PReLU branches (cheap pointwise glue, left in XLA).
    match_base = conv1x1_prelu(input_l, params["w_mb"], params["b_mb"], params["a_mb"])
    ref = conv1x1_prelu(input_s, params["w_m"], params["b_m"], params["a_m"])
    base = conv1x1_prelu(input_s, params["w_a"], params["b_a"], params["a_a"])
    Ck = match_base.shape[1]
    D = Ck * K * K

    # Patch matrices in channels-x-positions layout (L_l / L_s on the lane axis).
    QT = extract_patches_cm(match_base, K)                       # (N, D, L_l)
    WK = jnp.transpose(extract_patches_cm(ref, K), (0, 2, 1))    # (N, L_s, D)
    Rp = extract_patches_5d(base, K)                             # (N, L_s, C, K, K)
    # Flipped taps concatenated along rows: row (kh*K+kw)*C + c  <->  V_tap[l, c].
    VcatT = jnp.transpose(Rp[:, :, :, ::-1, ::-1],
                          (0, 3, 4, 2, 1)).reshape(N, K * K * C, L_s)
    RES = input_l.reshape(N, C, L_l)                             # free view of NCHW

    # Per-tap flat offsets and lane-dense validity masks for the conv_transpose.
    # Mask values carry the 0.25 conv_transpose normaliser so the kernel saves
    # one (C, L_l) multiply per batch element (0.25 is an exact power of two,
    # so the rounding is bit-identical to a post-scale).
    ph = jnp.arange(L_l) // W_l
    pw = jnp.arange(L_l) % W_l
    masks, offsets = [], []
    for kh in range(K):
        for kw in range(K):
            dh, dw = kh - 1, kw - 1
            offsets.append(dh * W_l + dw)
            valid = (((ph + dh) >= 0) & ((ph + dh) < H_l) &
                     ((pw + dw) >= 0) & ((pw + dw) < W_l))
            masks.append(valid.astype(jnp.float32) * 0.25)
    MASK = jnp.stack(masks, 0)                                   # (K*K, L_l)

    kernel = functools.partial(
        _pa_kernel, offsets=tuple(offsets), L_l=L_l, C=C,
        softmax_scale=float(softmax_scale), res_scale=float(res_scale),
        escape_nan=1e-4)

    out_flat = pl.pallas_call(
        kernel,
        out_shape=jax.ShapeDtypeStruct((N, C, L_l), jnp.float32),
        grid_spec=pltpu.PrefetchScalarGridSpec(
            num_scalar_prefetch=0,
            grid=(N,),
            in_specs=[
                pl.BlockSpec((None, D, L_l), lambda b: (b, 0, 0)),          # Q^T
                pl.BlockSpec((None, L_s, D), lambda b: (b, 0, 0)),          # keys
                pl.BlockSpec((None, K * K * C, L_s), lambda b: (b, 0, 0)),  # values (taps concat)
                pl.BlockSpec((K * K, L_l), lambda b: (0, 0)),               # masks (pre-scaled)
                pl.BlockSpec((None, C, L_l), lambda b: (b, 0, 0)),          # residual
            ],
            out_specs=pl.BlockSpec((None, C, L_l), lambda b: (b, 0, 0)),
        ),
        compiler_params=pltpu.CompilerParams(dimension_semantics=("parallel",)),
    )(QT.astype(jnp.float32), WK.astype(jnp.float32), VcatT.astype(value_dtype),
      MASK, RES.astype(jnp.float32))

    return out_flat.reshape(N, C, H_l, W_l)                      # back to NCHW (free)


# ------------------------- pure-JAX reference (check) ------------------------

def reference_forward(input_l, input_s, params, *, ksize=3,
                      softmax_scale=10.0, res_scale=1.0):
    match_base = conv1x1_prelu(input_l, params["w_mb"], params["b_mb"], params["a_mb"])
    ref = conv1x1_prelu(input_s, params["w_m"], params["b_m"], params["a_m"])
    base = conv1x1_prelu(input_s, params["w_a"], params["b_a"], params["a_a"])
    N = input_l.shape[0]
    K = ksize
    raw_w = extract_patches_5d(base, K)        # (N, L_s, C, K, K)
    w = extract_patches_5d(ref, K)             # (N, L_s, Ck, K, K)
    dn = ("NCHW", "OIHW", "NCHW")
    outs = []
    for i in range(N):
        xi = match_base[i:i + 1]
        wi = w[i]
        max_wi = jnp.sqrt(jnp.sum(wi ** 2, axis=(1, 2, 3), keepdims=True)) + 1e-4
        wi_n = wi / max_wi
        yi = jax.lax.conv_general_dilated(xi, wi_n, (1, 1), [(1, 1), (1, 1)],
                                          dimension_numbers=dn,
                                          precision=jax.lax.Precision.HIGHEST)
        yi = jax.nn.softmax(yi * softmax_scale, axis=1)
        raw_wi = raw_w[i]
        # conv_transpose2d(stride=1, padding=1) == conv2d with flipped, IO-swapped kernel, pad 1
        wt = jnp.transpose(raw_wi[:, :, ::-1, ::-1], (1, 0, 2, 3))
        yi = jax.lax.conv_general_dilated(yi, wt, (1, 1), [(1, 1), (1, 1)],
                                          dimension_numbers=dn,
                                          precision=jax.lax.Precision.HIGHEST) / 4.0
        outs.append(yi)
    return jnp.concatenate(outs, axis=0) + input_l * res_scale


# --------------------------------- main --------------------------------------

def init_params(key, channel, channels, reduction):
    Ck = channel // reduction
    ks = jax.random.split(key, 6)
    w = lambda k, o, i: jax.random.normal(k, (o, i), jnp.float32) * 0.2
    b = lambda k, o: jax.random.normal(k, (o,), jnp.float32) * 0.05
    return dict(
        w_mb=w(ks[0], Ck, channel), b_mb=b(ks[1], Ck), a_mb=jnp.float32(0.25),
        w_m=w(ks[2], Ck, channels), b_m=b(ks[3], Ck), a_m=jnp.float32(0.25),
        w_a=w(ks[4], channel, channels), b_a=b(ks[5], channel), a_a=jnp.float32(0.25),
    )


if __name__ == "__main__":
    key = jax.random.PRNGKey(0)
    k1, k2, k3 = jax.random.split(key, 3)

    N, C, H_l, W_l = 2, 8, 16, 16      # channel = channels = 8, reduction = 2
    H_s, W_s = 8, 8
    input_l = jax.random.normal(k1, (N, C, H_l, W_l), jnp.float32)
    input_s = jax.random.normal(k2, (N, C, H_s, W_s), jnp.float32)
    params = init_params(k3, C, C, reduction=2)

    out = jax.block_until_ready(pyramid_attention_forward(input_l, input_s, params))

    ref_out = jax.block_until_ready(reference_forward(input_l, input_s, params))
    assert out.shape == ref_out.shape == (N, C, H_l, W_l)
    err = float(jnp.max(jnp.abs(out - ref_out)))
    # Only the value/attention matmul operands are bf16 (score/softmax path is f32),
    # giving a few 1e-3 of absolute deviation vs the all-f32 conv reference; 3e-2
    # leaves a wide margin (value_dtype=jnp.float32 reproduces the reference <5e-3).
    if not (err < 3e-2):
        raise AssertionError(f"Pallas kernel mismatch vs reference, max abs err = {err}")
    print("KERNEL_OK")
</pallas_src>

<mosaic_0001>
module attributes {stable_mosaic.version = 11 : i64} {
  func.func @_pa_kernel(%arg0: i32, %arg1: memref<1x36x256xf32, #tpu.memory_space<vmem>>, %arg2: memref<1x64x36xf32, #tpu.memory_space<vmem>>, %arg3: memref<1x72x64xbf16, #tpu.memory_space<vmem>>, %arg4: memref<9x256xf32, #tpu.memory_space<vmem>>, %arg5: memref<1x8x256xf32, #tpu.memory_space<vmem>>, %arg6: memref<1x8x256xf32, #tpu.memory_space<vmem>>) attributes {dimension_semantics = [#tpu.dimension_semantics<parallel>], iteration_bounds = array<i64: 2>, scalar_prefetch = 0 : i64, scratch_operands = 0 : i64, tpu.core_type = #tpu.core_type<tc>, window_params = [{transform_indices = @transform_0, window_bounds = array<i64: 1, 36, 256>}, {transform_indices = @transform_1, window_bounds = array<i64: 1, 64, 36>}, {transform_indices = @transform_2, window_bounds = array<i64: 1, 72, 64>}, {pipeline_mode = #tpu.pipeline_mode<synchronous>, transform_indices = @transform_3, window_bounds = array<i64: 9, 256>}, {transform_indices = @transform_4, window_bounds = array<i64: 1, 8, 256>}, {transform_indices = @transform_5, window_bounds = array<i64: 1, 8, 256>}]} {
    %c0 = arith.constant 0 : index
    %c0_0 = arith.constant 0 : index
    %c0_1 = arith.constant 0 : index
    %0 = vector.load %arg2[%c0, %c0_0, %c0_1] : memref<1x64x36xf32, #tpu.memory_space<vmem>>, vector<1x64x36xf32>
    %1 = vector.shape_cast %0 : vector<1x64x36xf32> to vector<64x36xf32>
    %c0_2 = arith.constant 0 : index
    %c0_3 = arith.constant 0 : index
    %c0_4 = arith.constant 0 : index
    %2 = vector.load %arg1[%c0_2, %c0_3, %c0_4] : memref<1x36x256xf32, #tpu.memory_space<vmem>>, vector<1x36x256xf32>
    %3 = vector.shape_cast %2 : vector<1x36x256xf32> to vector<36x256xf32>
    %4 = arith.mulf %1, %1 : vector<64x36xf32>
    %cst = arith.constant dense<0.000000e+00> : vector<64xf32>
    %5 = vector.multi_reduction <add>, %4, %cst [1] : vector<64x36xf32> to vector<64xf32>
    %6 = vector.shape_cast %5 : vector<64xf32> to vector<64x1xf32>
    %7 = math.sqrt %6 : vector<64x1xf32>
    %cst_5 = arith.constant 9.99999974E-5 : f32
    %8 = vector.broadcast %cst_5 : f32 to vector<64x1xf32>
    %9 = arith.addf %7, %8 : vector<64x1xf32>
    %10 = tpu.reciprocal %9 : vector<64x1xf32> -> vector<64x1xf32>
    %cst_6 = arith.constant 1.000000e+01 : f32
    %11 = vector.broadcast %cst_6 : f32 to vector<64x1xf32>
    %12 = arith.mulf %11, %10 : vector<64x1xf32>
    %cst_7 = arith.constant dense<0.000000e+00> : vector<64x256xf32>
    %13 = tpu.matmul %1, %3, %cst_7 {dimension_numbers = #tpu.dot_dimension_numbers<[1], [0], [0], [1], [0, 0, 1, 1], [], []>} : vector<64x36xf32>, vector<36x256xf32>, vector<64x256xf32> -> vector<64x256xf32>
    %14 = vector.broadcast %12 : vector<64x1xf32> to vector<64x256xf32>
    %15 = arith.mulf %13, %14 : vector<64x256xf32>
    %cst_8 = arith.constant dense<0xFF800000> : vector<256xf32>
    %16 = vector.multi_reduction <maximumf>, %15, %cst_8 [0] : vector<64x256xf32> to vector<256xf32>
    %17 = vector.shape_cast %16 : vector<256xf32> to vector<1x256xf32>
    %18 = vector.broadcast %17 : vector<1x256xf32> to vector<64x256xf32>
    %19 = arith.subf %15, %18 : vector<64x256xf32>
    %20 = math.exp %19 : vector<64x256xf32>
    %cst_9 = arith.constant dense<0.000000e+00> : vector<256xf32>
    %21 = vector.multi_reduction <add>, %20, %cst_9 [0] : vector<64x256xf32> to vector<256xf32>
    %22 = vector.shape_cast %21 : vector<256xf32> to vector<1x256xf32>
    %23 = tpu.reciprocal %22 {approx = true} : vector<1x256xf32> -> vector<1x256xf32>
    %24 = vector.broadcast %23 : vector<1x256xf32> to vector<64x256xf32>
    %25 = arith.mulf %20, %24 : vector<64x256xf32>
    %c0_10 = arith.constant 0 : index
    %c0_11 = arith.constant 0 : index
    %c0_12 = arith.constant 0 : index
    %26 = vector.load %arg3[%c0_10, %c0_11, %c0_12] : memref<1x72x64xbf16, #tpu.memory_space<vmem>>, vector<1x72x64xbf16>
    %27 = vector.shape_cast %26 : vector<1x72x64xbf16> to vector<72x64xbf16>
    %28 = arith.truncf %25 : vector<64x256xf32> to vector<64x256xbf16>
    %cst_13 = arith.constant dense<0.000000e+00> : vector<72x256xf32>
    %29 = tpu.matmul %27, %28, %cst_13 {dimension_numbers = #tpu.dot_dimension_numbers<[1], [0], [0], [1], [0, 0, 1, 1], [], []>} : vector<72x64xbf16>, vector<64x256xbf16>, vector<72x256xf32> -> vector<72x256xf32>
    %c0_14 = arith.constant 0 : index
    %c0_15 = arith.constant 0 : index
    %30 = vector.load %arg4[%c0_14, %c0_15] : memref<9x256xf32, #tpu.memory_space<vmem>>, vector<9x256xf32>
    %cst_16 = arith.constant 0.000000e+00 : f32
    %31 = vector.broadcast %cst_16 : f32 to vector<8x256xf32>
    %32 = vector.extract_strided_slice %29 {offsets = [0, 0], sizes = [8, 256], strides = [1, 1]} : vector<72x256xf32> to vector<8x256xf32>
    %c17_i32 = arith.constant 17 : i32
    %33 = tpu.dynamic_rotate %32 by %c17_i32 dim 1 : vector<8x256xf32>, i32 -> vector<8x256xf32>
    %34 = vector.extract_strided_slice %30 {offsets = [0, 0], sizes = [1, 256], strides = [1, 1]} : vector<9x256xf32> to vector<1x256xf32>
    %35 = vector.broadcast %34 : vector<1x256xf32> to vector<8x256xf32>
    %36 = arith.mulf %33, %35 : vector<8x256xf32>
    %37 = arith.addf %31, %36 : vector<8x256xf32>
    %38 = vector.extract_strided_slice %29 {offsets = [8, 0], sizes = [8, 256], strides = [1, 1]} : vector<72x256xf32> to vector<8x256xf32>
    %c16_i32 = arith.constant 16 : i32
    %39 = tpu.dynamic_rotate %38 by %c16_i32 dim 1 : vector<8x256xf32>, i32 -> vector<8x256xf32>
    %40 = vector.extract_strided_slice %30 {offsets = [1, 0], sizes = [1, 256], strides = [1, 1]} : vector<9x256xf32> to vector<1x256xf32>
    %41 = vector.broadcast %40 : vector<1x256xf32> to vector<8x256xf32>
    %42 = arith.mulf %39, %41 : vector<8x256xf32>
    %43 = arith.addf %37, %42 : vector<8x256xf32>
    %44 = vector.extract_strided_slice %29 {offsets = [16, 0], sizes = [8, 256], strides = [1, 1]} : vector<72x256xf32> to vector<8x256xf32>
    %c15_i32 = arith.constant 15 : i32
    %45 = tpu.dynamic_rotate %44 by %c15_i32 dim 1 : vector<8x256xf32>, i32 -> vector<8x256xf32>
    %46 = vector.extract_strided_slice %30 {offsets = [2, 0], sizes = [1, 256], strides = [1, 1]} : vector<9x256xf32> to vector<1x256xf32>
    %47 = vector.broadcast %46 : vector<1x256xf32> to vector<8x256xf32>
    %48 = arith.mulf %45, %47 : vector<8x256xf32>
    %49 = arith.addf %43, %48 : vector<8x256xf32>
    %50 = vector.extract_strided_slice %29 {offsets = [24, 0], sizes = [8, 256], strides = [1, 1]} : vector<72x256xf32> to vector<8x256xf32>
    %c1_i32 = arith.constant 1 : i32
    %51 = tpu.dynamic_rotate %50 by %c1_i32 dim 1 : vector<8x256xf32>, i32 -> vector<8x256xf32>
    %52 = vector.extract_strided_slice %30 {offsets = [3, 0], sizes = [1, 256], strides = [1, 1]} : vector<9x256xf32> to vector<1x256xf32>
    %53 = vector.broadcast %52 : vector<1x256xf32> to vector<8x256xf32>
    %54 = arith.mulf %51, %53 : vector<8x256xf32>
    %55 = arith.addf %49, %54 : vector<8x256xf32>
    %56 = vector.extract_strided_slice %29 {offsets = [32, 0], sizes = [8, 256], strides = [1, 1]} : vector<72x256xf32> to vector<8x256xf32>
    %57 = vector.extract_strided_slice %30 {offsets = [4, 0], sizes = [1, 256], strides = [1, 1]} : vector<9x256xf32> to vector<1x256xf32>
    %58 = vector.broadcast %57 : vector<1x256xf32> to vector<8x256xf32>
    %59 = arith.mulf %56, %58 : vector<8x256xf32>
    %60 = arith.addf %55, %59 : vector<8x256xf32>
    %61 = vector.extract_strided_slice %29 {offsets = [40, 0], sizes = [8, 256], strides = [1, 1]} : vector<72x256xf32> to vector<8x256xf32>
    %c255_i32 = arith.constant 255 : i32
    %62 = tpu.dynamic_rotate %61 by %c255_i32 dim 1 : vector<8x256xf32>, i32 -> vector<8x256xf32>
    %63 = vector.extract_strided_slice %30 {offsets = [5, 0], sizes = [1, 256], strides = [1, 1]} : vector<9x256xf32> to vector<1x256xf32>
    %64 = vector.broadcast %63 : vector<1x256xf32> to vector<8x256xf32>
    %65 = arith.mulf %62, %64 : vector<8x256xf32>
    %66 = arith.addf %60, %65 : vector<8x256xf32>
    %67 = vector.extract_strided_slice %29 {offsets = [48, 0], sizes = [8, 256], strides = [1, 1]} : vector<72x256xf32> to vector<8x256xf32>
    %c241_i32 = arith.constant 241 : i32
    %68 = tpu.dynamic_rotate %67 by %c241_i32 dim 1 : vector<8x256xf32>, i32 -> vector<8x256xf32>
    %69 = vector.extract_strided_slice %30 {offsets = [6, 0], sizes = [1, 256], strides = [1, 1]} : vector<9x256xf32> to vector<1x256xf32>
    %70 = vector.broadcast %69 : vector<1x256xf32> to vector<8x256xf32>
    %71 = arith.mulf %68, %70 : vector<8x256xf32>
    %72 = arith.addf %66, %71 : vector<8x256xf32>
    %73 = vector.extract_strided_slice %29 {offsets = [56, 0], sizes = [8, 256], strides = [1, 1]} : vector<72x256xf32> to vector<8x256xf32>
    %c240_i32 = arith.constant 240 : i32
    %74 = tpu.dynamic_rotate %73 by %c240_i32 dim 1 : vector<8x256xf32>, i32 -> vector<8x256xf32>
    %75 = vector.extract_strided_slice %30 {offsets = [7, 0], sizes = [1, 256], strides = [1, 1]} : vector<9x256xf32> to vector<1x256xf32>
    %76 = vector.broadcast %75 : vector<1x256xf32> to vector<8x256xf32>
    %77 = arith.mulf %74, %76 : vector<8x256xf32>
    %78 = arith.addf %72, %77 : vector<8x256xf32>
    %79 = vector.extract_strided_slice %29 {offsets = [64, 0], sizes = [8, 256], strides = [1, 1]} : vector<72x256xf32> to vector<8x256xf32>
    %c239_i32 = arith.constant 239 : i32
    %80 = tpu.dynamic_rotate %79 by %c239_i32 dim 1 : vector<8x256xf32>, i32 -> vector<8x256xf32>
    %81 = vector.extract_strided_slice %30 {offsets = [8, 0], sizes = [1, 256], strides = [1, 1]} : vector<9x256xf32> to vector<1x256xf32>
    %82 = vector.broadcast %81 : vector<1x256xf32> to vector<8x256xf32>
    %83 = arith.mulf %80, %82 : vector<8x256xf32>
    %84 = arith.addf %78, %83 : vector<8x256xf32>
    %c0_17 = arith.constant 0 : index
    %c0_18 = arith.constant 0 : index
    %c0_19 = arith.constant 0 : index
    %85 = vector.load %arg5[%c0_17, %c0_18, %c0_19] : memref<1x8x256xf32, #tpu.memory_space<vmem>>, vector<1x8x256xf32>
    %86 = vector.shape_cast %85 : vector<1x8x256xf32> to vector<8x256xf32>
    %87 = arith.addf %84, %86 : vector<8x256xf32>
    %c0_20 = arith.constant 0 : index
    %c0_21 = arith.constant 0 : index
    %c0_22 = arith.constant 0 : index
    %88 = vector.load %arg6[%c0_20, %c0_21, %c0_22] : memref<1x8x256xf32, #tpu.memory_space<vmem>>, vector<1x8x256xf32>
    %89 = vector.shape_cast %88 : vector<1x8x256xf32> to vector<8x256xf32>
    %90 = vector.shape_cast %87 : vector<8x256xf32> to vector<1x8x256xf32>
    tpu.vector_store %arg6[%c0_20, %c0_21, %c0_22], %90 {strides = array<i32>} : memref<1x8x256xf32, #tpu.memory_space<vmem>>, vector<1x8x256xf32>,
    return
  }
  func.func @transform_0(%arg0: i32) -> (i32, i32, i32) {
    %c0_i32 = arith.constant 0 : i32
    %c0_i32_0 = arith.constant 0 : i32
    %c0_i32_1 = arith.constant 0 : i32
    return %arg0, %c0_i32, %c0_i32_0 : i32, i32, i32
  }
  func.func @transform_1(%arg0: i32) -> (i32, i32, i32) {
    %c0_i32 = arith.constant 0 : i32
    %c0_i32_0 = arith.constant 0 : i32
    %c0_i32_1 = arith.constant 0 : i32
    return %arg0, %c0_i32, %c0_i32_0 : i32, i32, i32
  }
  func.func @transform_2(%arg0: i32) -> (i32, i32, i32) {
    %c0_i32 = arith.constant 0 : i32
    %c0_i32_0 = arith.constant 0 : i32
    %c0_i32_1 = arith.constant 0 : i32
    return %arg0, %c0_i32, %c0_i32_0 : i32, i32, i32
  }
  func.func @transform_3(%arg0: i32) -> (i32, i32) {
    %c0_i32 = arith.constant 0 : i32
    %c0_i32_0 = arith.constant 0 : i32
    %c0_i32_1 = arith.constant 0 : i32
    return %c0_i32, %c0_i32_0 : i32, i32
  }
  func.func @transform_4(%arg0: i32) -> (i32, i32, i32) {
    %c0_i32 = arith.constant 0 : i32
    %c0_i32_0 = arith.constant 0 : i32
    %c0_i32_1 = arith.constant 0 : i32
    return %arg0, %c0_i32, %c0_i32_0 : i32, i32, i32
  }
  func.func @transform_5(%arg0: i32) -> (i32, i32, i32) {
    %c0_i32 = arith.constant 0 : i32
    %c0_i32_0 = arith.constant 0 : i32
    %c0_i32_1 = arith.constant 0 : i32
    return %arg0, %c0_i32, %c0_i32_0 : i32, i32, i32
  }
}

</mosaic_0001>

<llo_original>
// kernel: tpu_custom_call.1
$region0: #{tpu_custom_call.1}
  #allocation0 [shape = 'u32[]', space=smem, size = 0x4, offset = 0x4, fixed_abs, tag = 'smem constant byte address 0x4 - core index']
  #allocation1 [shape = 'u32[144,128]{1,0:T(1,128)}', space=vmem, size = 0x12000, scoped, tag = 'internal scratch']
  %s0 = inlined_call_operand.vmem [shape: f32[2,36,256], index: 0, kind: input, shape index: {}]
  %s1 = inlined_call_operand.vmem [shape: f32[2,64,36], index: 1, kind: input, shape index: {}]
  %s2 = inlined_call_operand.vmem [shape: bf16[2,72,64], index: 2, kind: input, shape index: {}]
  %s3 = inlined_call_operand.vmem [shape: f32[9,256], index: 3, kind: input, shape index: {}]
  %s4 = inlined_call_operand.vmem [shape: f32[2,8,256], index: 4, kind: input, shape index: {}]
  %s5 = inlined_call_operand.hbm [shape: f32[2,8,256], index: 5, kind: output, shape index: {}]
  %s6 = sld [smem:[#allocation0]]
  $region53: #{tpu_custom_call.1} parent=0
    _
  %s8 = ssub.s32 1, %s6
  %s9 = scalar_select 0, %s8, %s6
  $region1: #{tpu_custom_call.1} parent=0
    #allocation2 [shape = 'u8[16384]{0}', space=vmem, size = 0x4000, scoped, tag = 'output window, operand 0']
    #allocation3 [shape = 's32[2]{0}', space=sflag, size = 0x8, scoped, tag = 'scoped memory for tpu_custom_call.1']
    %10 = vsyncpa [#allocation3], 0
    %s11 = scalar_lea.sflag [#allocation3], 1
    %12 = vsyncpa %s11, 0
    loop: start=0, step=1, limit=4
    $region2: #{tpu_custom_call.1} parent=1 // loop_pre_header
      _
    $region3: #{tpu_custom_call.1} parent=1 // loop_header
      %s14 = sphi 0, %s18
      %p15 = scmp.ge.s32.totalorder %s14, 4
      %s24 = sphi 0, %s26
      %s27 = sphi 0, %s24
      %s28 = sphi 0, %s27
      %s44 = sphi 0, %s28
      %s50 = sphi 0, %s52
      %s53 = sphi 0, %s50
      %s54 = sphi 0, %s53
      %s70 = sphi 0, %s54
      %s76 = sphi 0, %s78
      %s79 = sphi 0, %s76
      %s80 = sphi 0, %s79
      %s96 = sphi 0, %s80
      %s100 = sphi 0, %s100
      %s102 = sphi 0, %s100
      %s103 = sphi 0, %s102
      %s117 = sphi 0, %s103
      %s123 = sphi 0, %s125
      %s126 = sphi 0, %s123
      %s127 = sphi 0, %s126
      %s143 = sphi 0, %s127
      %s149 = sphi 0, %s151
      %s152 = sphi 0, %s149
      %s153 = sphi 0, %s152
      %s169 = sphi 0, %s153
    $region4: #{tpu_custom_call.1} parent=1 // loop_header_branch
      %17 = sbr.rel (%p15) target = $region8
    $region5: #{tpu_custom_call.1} parent=1 // loop_body
      %s19 = ssub.s32 %s14, 1
      %s20 = ssub.s32 %s14, 2
      %s21 = sadd.s32 %s14, 1
      %s22 = ssub.s32 %s14, %s21
      %p23 = scmp.eq.s32.totalorder %s22, 0
      %s25 = sadd.s32 %s24, 1
      %s26 = scalar_select %p23, %s24, %s25
      %p29 = pneg %p23
      %p30 = scmp.eq.s32.totalorder %s14, 1
      %p31 = por %p29, %p30
      %p32 = scmp.ne.s32.totalorder %s24, %s27
      %p33 = scmp.eq.s32.totalorder %s14, 0
      %p34 = por %p32, %p33
      %p35 = scmp.ne.s32.totalorder %s24, %s27
      %p36 = scmp.eq.s32.totalorder %s19, 1
      %p37 = por %p35, %p36
      %p38 = scmp.ne.s32.totalorder %s27, %s28
      %p39 = scmp.eq.s32.totalorder %s19, 0
      %p40 = por %p38, %p39
      %p41 = scmp.ne.s32.totalorder %s27, %s28
      %p42 = scmp.eq.s32.totalorder %s20, 1
      %p43 = por %p41, %p42
      %p45 = scmp.ne.s32.totalorder %s28, %s44
      %p46 = scmp.eq.s32.totalorder %s20, 0
      %p47 = por %p45, %p46
      %s48 = ssub.s32 %s14, %s21
      %p49 = scmp.eq.s32.totalorder %s48, 0
      %s51 = sadd.s32 %s50, 1
      %s52 = scalar_select %p49, %s50, %s51
      %p55 = pneg %p49
      %p56 = scmp.eq.s32.totalorder %s14, 1
      %p57 = por %p55, %p56
      %p58 = scmp.ne.s32.totalorder %s50, %s53
      %p59 = scmp.eq.s32.totalorder %s14, 0
      %p60 = por %p58, %p59
      %p61 = scmp.ne.s32.totalorder %s50, %s53
      %p62 = scmp.eq.s32.totalorder %s19, 1
      %p63 = por %p61, %p62
      %p64 = scmp.ne.s32.totalorder %s53, %s54
      %p65 = scmp.eq.s32.totalorder %s19, 0
      %p66 = por %p64, %p65
      %p67 = scmp.ne.s32.totalorder %s53, %s54
      %p68 = scmp.eq.s32.totalorder %s20, 1
      %p69 = por %p67, %p68
      %p71 = scmp.ne.s32.totalorder %s54, %s70
      %p72 = scmp.eq.s32.totalorder %s20, 0
      %p73 = por %p71, %p72
      %s74 = ssub.s32 %s14, %s21
      %p75 = scmp.eq.s32.totalorder %s74, 0
      %s77 = sadd.s32 %s76, 1
      %s78 = scalar_select %p75, %s76, %s77
      %p81 = pneg %p75
      %p82 = scmp.eq.s32.totalorder %s14, 1
      %p83 = por %p81, %p82
      %p84 = scmp.ne.s32.totalorder %s76, %s79
      %p85 = scmp.eq.s32.totalorder %s14, 0
      %p86 = por %p84, %p85
      %p87 = scmp.ne.s32.totalorder %s76, %s79
      %p88 = scmp.eq.s32.totalorder %s19, 1
      %p89 = por %p87, %p88
      %p90 = scmp.ne.s32.totalorder %s79, %s80
      %p91 = scmp.eq.s32.totalorder %s19, 0
      %p92 = por %p90, %p91
      %p93 = scmp.ne.s32.totalorder %s79, %s80
      %p94 = scmp.eq.s32.totalorder %s20, 1
      %p95 = por %p93, %p94
      %p97 = scmp.ne.s32.totalorder %s80, %s96
      %p98 = scmp.eq.s32.totalorder %s20, 0
      %p99 = por %p97, %p98
      %s101 = sadd.s32 %s100, 1
      %p104 = scmp.eq.s32.totalorder %s14, 1
      %p105 = scmp.ne.s32.totalorder %s100, %s102
      %p106 = scmp.eq.s32.totalorder %s14, 0
      %p107 = por %p105, %p106
      %p108 = scmp.ne.s32.totalorder %s100, %s102
      %p109 = scmp.eq.s32.totalorder %s19, 1
      %p110 = por %p108, %p109
      %p111 = scmp.ne.s32.totalorder %s102, %s103
      %p112 = scmp.eq.s32.totalorder %s19, 0
      %p113 = por %p111, %p112
      %p114 = scmp.ne.s32.totalorder %s102, %s103
      %p115 = scmp.eq.s32.totalorder %s20, 1
      %p116 = por %p114, %p115
      %p118 = scmp.ne.s32.totalorder %s103, %s117
      %p119 = scmp.eq.s32.totalorder %s20, 0
      %p120 = por %p118, %p119
      %s121 = ssub.s32 %s14, %s21
      %p122 = scmp.eq.s32.totalorder %s121, 0
      %s124 = sadd.s32 %s123, 1
      %s125 = scalar_select %p122, %s123, %s124
      %p128 = pneg %p122
      %p129 = scmp.eq.s32.totalorder %s14, 1
      %p130 = por %p128, %p129
      %p131 = scmp.ne.s32.totalorder %s123, %s126
      %p132 = scmp.eq.s32.totalorder %s14, 0
      %p133 = por %p131, %p132
      %p134 = scmp.ne.s32.totalorder %s123, %s126
      %p135 = scmp.eq.s32.totalorder %s19, 1
      %p136 = por %p134, %p135
      %p137 = scmp.ne.s32.totalorder %s126, %s127
      %p138 = scmp.eq.s32.totalorder %s19, 0
      %p139 = por %p137, %p138
      %p140 = scmp.ne.s32.totalorder %s126, %s127
      %p141 = scmp.eq.s32.totalorder %s20, 1
      %p142 = por %p140, %p141
      %p144 = scmp.ne.s32.totalorder %s127, %s143
      %p145 = scmp.eq.s32.totalorder %s20, 0
      %p146 = por %p144, %p145
      %s147 = ssub.s32 %s14, %s21
      %p148 = scmp.eq.s32.totalorder %s147, 0
      %s150 = sadd.s32 %s149, 1
      %s151 = scalar_select %p148, %s149, %s150
      %p154 = pneg %p148
      %p155 = scmp.eq.s32.totalorder %s14, 1
      %p156 = por %p154, %p155
      %p157 = scmp.ne.s32.totalorder %s149, %s152
      %p158 = scmp.eq.s32.totalorder %s14, 0
      %p159 = por %p157, %p158
      %p160 = scmp.ne.s32.totalorder %s149, %s152
      %p161 = scmp.eq.s32.totalorder %s19, 1
      %p162 = por %p160, %p161
      %p163 = scmp.ne.s32.totalorder %s152, %s153
      %p164 = scmp.eq.s32.totalorder %s19, 0
      %p165 = por %p163, %p164
      %p166 = scmp.ne.s32.totalorder %s152, %s153
      %p167 = scmp.eq.s32.totalorder %s20, 1
      %p168 = por %p166, %p167
      %p170 = scmp.ne.s32.totalorder %s153, %s169
      %p171 = scmp.eq.s32.totalorder %s20, 0
      %p172 = por %p170, %p171
      %p173 = scmp.le.s32.totalorder 1, %s14
      %p174 = scmp.lt.s32.totalorder %s14, 3
      %p175 = pnand %p173, %p174
      %p176 = pneg %p175
      // Predicated region
      $region9: #{tpu_custom_call.1} parent=5 // pred_check
        _
      $region10: #{tpu_custom_call.1} parent=5 // pred_check_branch
        %178 = sbr.rel (%p175) target = $region12
      $region11: #{tpu_custom_call.1} parent=5 // pred_region
        %s179 = ssub.s32 %s14, 1
        // Predicated region
        $region13: #{tpu_custom_call.1} parent=11 // pred_check
          %p180 = pneg %p113
        $region14: #{tpu_custom_call.1} parent=11 // pred_check_branch
          %182 = sbr.rel (%p180) target = $region16
        $region15: #{tpu_custom_call.1} parent=11 // pred_region
          _
        $region16: #{tpu_custom_call.1} parent=11 // pred_fallthru
          _
      $region12: #{tpu_custom_call.1} parent=5 // pred_fallthru
        _
      %p183 = scmp.lt.s32.totalorder %s14, 2
      // Predicated region
      $region17: #{tpu_custom_call.1} parent=5 // pred_check
        %p184 = pneg %p183
      $region18: #{tpu_custom_call.1} parent=5 // pred_check_branch
        %186 = sbr.rel (%p184) target = $region20
      $region19: #{tpu_custom_call.1} parent=5 // pred_region
        // Predicated region
        $region21: #{tpu_custom_call.1} parent=19 // pred_check
          %p187 = pneg %p34
        $region22: #{tpu_custom_call.1} parent=19 // pred_check_branch
          %189 = sbr.rel (%p187) target = $region24
        $region23: #{tpu_custom_call.1} parent=19 // pred_region
          %p190 = scmp.lt.s32.totalorder %s14, 1
          %s191 = scalar_select %p190, %s14, 1
          %s192 = smul.addr %s191, 10
          %s193 = smul.addr %s192, 8
          %s194 = scalar_lea.vmem %s0, %s193
        $region24: #{tpu_custom_call.1} parent=19 // pred_fallthru
          _
        // Predicated region
        $region25: #{tpu_custom_call.1} parent=19 // pred_check
          %p195 = pneg %p60
        $region26: #{tpu_custom_call.1} parent=19 // pred_check_branch
          %197 = sbr.rel (%p195) target = $region28
        $region27: #{tpu_custom_call.1} parent=19 // pred_region
          %p198 = scmp.lt.s32.totalorder %s14, 1
          %s199 = scalar_select %p198, %s14, 1
          %s200 = smul.addr %s199, 8
          %s201 = smul.addr %s200, 8
          %s202 = scalar_lea.vmem %s1, %s201
        $region28: #{tpu_custom_call.1} parent=19 // pred_fallthru
          _
        // Predicated region
        $region29: #{tpu_custom_call.1} parent=19 // pred_check
          %p203 = pneg %p86
        $region30: #{tpu_custom_call.1} parent=19 // pred_check_branch
          %205 = sbr.rel (%p203) target = $region32
        $region31: #{tpu_custom_call.1} parent=19 // pred_region
          %p206 = scmp.lt.s32.totalorder %s14, 1
          %s207 = scalar_select %p206, %s14, 1
          %s208 = smul.addr %s207, 9
          %s209 = smul.addr %s208, 4
          %s210 = scalar_lea.vmem %s2, %s209
        $region32: #{tpu_custom_call.1} parent=19 // pred_fallthru
          _
        // Predicated region
        $region33: #{tpu_custom_call.1} parent=19 // pred_check
          %p211 = pneg %p133
        $region34: #{tpu_custom_call.1} parent=19 // pred_check_branch
          %213 = sbr.rel (%p211) target = $region36
        $region35: #{tpu_custom_call.1} parent=19 // pred_region
          %p214 = scmp.lt.s32.totalorder %s14, 1
          %s215 = scalar_select %p214, %s14, 1
          %s216 = smul.addr %s215, 2
          %s217 = smul.addr %s216, 8
          %s218 = scalar_lea.vmem %s4, %s217
        $region36: #{tpu_custom_call.1} parent=19 // pred_fallthru
          _
      $region20: #{tpu_custom_call.1} parent=5 // pred_fallthru
        _
      %p219 = scmp.le.s32.totalorder 1, %s14
      %p220 = scmp.lt.s32.totalorder %s14, 3
      %p221 = pnand %p219, %p220
      %p222 = pneg %p221
      // Predicated region
      $region37: #{tpu_custom_call.1} parent=5 // pred_check
        _
      $region38: #{tpu_custom_call.1} parent=5 // pred_check_branch
        %224 = sbr.rel (%p221) target = $region40
      $region39: #{tpu_custom_call.1} parent=5 // pred_region
        %s225 = ssub.s32 %s14, 1
        %p226 = scmp.lt.s32.totalorder %s19, 1
        %s227 = scalar_select %p226, %s19, 1
        %s228 = smul.addr %s227, 10
        %s229 = smul.addr %s228, 8
        %s230 = scalar_lea.vmem %s0, %s229
        %p231 = pneg %p40
        %p232 = pneg %p37
        %p233 = scmp.lt.s32.totalorder %s19, 1
        %s234 = scalar_select %p233, %s19, 1
        %s235 = smul.addr %s234, 8
        %s236 = smul.addr %s235, 8
        %s237 = scalar_lea.vmem %s1, %s236
        %p238 = pneg %p66
        %p239 = pneg %p63
        %p240 = scmp.lt.s32.totalorder %s19, 1
        %s241 = scalar_select %p240, %s19, 1
        %s242 = smul.addr %s241, 9
        %s243 = smul.addr %s242, 4
        %s244 = scalar_lea.vmem %s2, %s243
        %p245 = pneg %p92
        %p246 = pneg %p89
        %p247 = pneg %p113
        %p248 = pneg %p110
        %p249 = scmp.lt.s32.totalorder %s19, 1
        %s250 = scalar_select %p249, %s19, 1
        %s251 = smul.addr %s250, 2
        %s252 = smul.addr %s251, 8
        %s253 = scalar_lea.vmem %s4, %s252
        %p254 = pneg %p139
        %p255 = pneg %p136
        %p256 = pneg %p165
        %p257 = pneg %p162
        %s258 = sand.u32 %s152, 1
        %s259 = scalar_lea.sflag [#allocation3], %s258
        %s260 = sand.u32 %s152, 1
        %s261 = smul.addr %s260, 16
        %s262 = scalar_lea.vmem [#allocation2], %s261
        %p263 = scmp.lt.s32.totalorder %s19, 1
        %s264 = scalar_select %p263, %s19, 1
        %s265 = smul.addr %s264, 10
        %s266 = smul.addr %s265, 8
        %s267 = scalar_lea.vmem %s0, %s266
        %p268 = scmp.lt.s32.totalorder %s19, 1
        %s269 = scalar_select %p268, %s19, 1
        %s270 = smul.addr %s269, 8
        %s271 = smul.addr %s270, 8
        %s272 = scalar_lea.vmem %s1, %s271
        %p273 = scmp.lt.s32.totalorder %s19, 1
        %s274 = scalar_select %p273, %s19, 1
        %s275 = smul.addr %s274, 9
        %s276 = smul.addr %s275, 4
        %s277 = scalar_lea.vmem %s2, %s276
        %p278 = scmp.lt.s32.totalorder %s19, 1
        %s279 = scalar_select %p278, %s19, 1
        %s280 = smul.addr %s279, 2
        %s281 = smul.addr %s280, 8
        %s282 = scalar_lea.vmem %s4, %s281
        %v284 = vld [vmem:[%s272] sm:$0xff]
        %v285 = vld [vmem:[%s272 + $0x8] sm:$0xff]
        %v286 = vld [vmem:[%s272 + $0x10] sm:$0xff]
        %v287 = vld [vmem:[%s272 + $0x18] sm:$0xff]
        %v288 = vld [vmem:[%s272 + $0x20] sm:$0xff]
        %v289 = vld [vmem:[%s272 + $0x28] sm:$0xff]
        %v290 = vld [vmem:[%s272 + $0x30] sm:$0xff]
        %v291 = vld [vmem:[%s272 + $0x38] sm:$0xff]
        %v292 = vld [vmem:[%s267] sm:$0xff]
        %v293 = vld [vmem:[%s267 + $0x8] sm:$0xff]
        %v294 = vld [vmem:[%s267 + $0x10] sm:$0xff]
        %v295 = vld [vmem:[%s267 + $0x18] sm:$0xff]
        %v296 = vld [vmem:[%s267 + $0x20] sm:$0xff]
        %v297 = vld [vmem:[%s267 + $0x28] sm:$0xff]
        %v298 = vld [vmem:[%s267 + $0x30] sm:$0xff]
        %v299 = vld [vmem:[%s267 + $0x38] sm:$0xff]
        %v300 = vld [vmem:[%s267 + $0x40] sm:$0xf]
        %v301 = vld [vmem:[%s267 + $0x48] sm:$0xf]
        %v302 = vmul.f32 %v284, %v284
        %v303 = vmul.f32 %v285, %v285
        %v304 = vmul.f32 %v286, %v286
        %v305 = vmul.f32 %v287, %v287
        %v306 = vmul.f32 %v288, %v288
        %v307 = vmul.f32 %v289, %v289
        %v308 = vmul.f32 %v290, %v290
        %v309 = vmul.f32 %v291, %v291
        %vm310 = vcmask 293888
        %v311 = vsel %vm310, %v302, 0.0
        %312 = vadd.xlane.f32.xlu0 %v311
        %v313 = vpop.xlane.xlu0 %312
        %v314 = vsel %vm310, %v303, 0.0
        %315 = vadd.xlane.f32.xlu0 %v314
        %v316 = vpop.xlane.xlu0 %315
        %v317 = vsel %vm310, %v304, 0.0
        %318 = vadd.xlane.f32.xlu0 %v317
        %v319 = vpop.xlane.xlu0 %318
        %v320 = vsel %vm310, %v305, 0.0
        %321 = vadd.xlane.f32.xlu0 %v320
        %v322 = vpop.xlane.xlu0 %321
        %v323 = vsel %vm310, %v306, 0.0
        %324 = vadd.xlane.f32.xlu0 %v323
        %v325 = vpop.xlane.xlu0 %324
        %v326 = vsel %vm310, %v307, 0.0
        %327 = vadd.xlane.f32.xlu0 %v326
        %v328 = vpop.xlane.xlu0 %327
        %v329 = vsel %vm310, %v308, 0.0
        %330 = vadd.xlane.f32.xlu0 %v329
        %v331 = vpop.xlane.xlu0 %330
        %v332 = vsel %vm310, %v309, 0.0
        %333 = vadd.xlane.f32.xlu0 %v332
        %v334 = vpop.xlane.xlu0 %333
        %v335 = vrsqrt.pop %v313
        %v336 = vmul.f32 %v313, %v335
        %vm337 = vcmp.eq.f32.partialorder %v313, inf
        %v338 = vsel %vm337, %v313, %v336
        %vm339 = vcmp.eq.f32.partialorder %v313, 0.0
        %v340 = vand.u32 %v313, 2147483648
        %v341 = vsel %vm339, %v340, %v338
        %v342 = vrsqrt.pop %v316
        %v343 = vmul.f32 %v316, %v342
        %vm344 = vcmp.eq.f32.partialorder %v316, inf
        %v345 = vsel %vm344, %v316, %v343
        %vm346 = vcmp.eq.f32.partialorder %v316, 0.0
        %v347 = vand.u32 %v316, 2147483648
        %v348 = vsel %vm346, %v347, %v345
        %v349 = vrsqrt.pop %v319
        %v350 = vmul.f32 %v319, %v349
        %vm351 = vcmp.eq.f32.partialorder %v319, inf
        %v352 = vsel %vm351, %v319, %v350
        %vm353 = vcmp.eq.f32.partialorder %v319, 0.0
        %v354 = vand.u32 %v319, 2147483648
        %v355 = vsel %vm353, %v354, %v352
        %v356 = vrsqrt.pop %v322
        %v357 = vmul.f32 %v322, %v356
        %vm358 = vcmp.eq.f32.partialorder %v322, inf
        %v359 = vsel %vm358, %v322, %v357
        %vm360 = vcmp.eq.f32.partialorder %v322, 0.0
        %v361 = vand.u32 %v322, 2147483648
        %v362 = vsel %vm360, %v361, %v359
        %v363 = vrsqrt.pop %v325
        %v364 = vmul.f32 %v325, %v363
        %vm365 = vcmp.eq.f32.partialorder %v325, inf
        %v366 = vsel %vm365, %v325, %v364
        %vm367 = vcmp.eq.f32.partialorder %v325, 0.0
        %v368 = vand.u32 %v325, 2147483648
        %v369 = vsel %vm367, %v368, %v366
        %v370 = vrsqrt.pop %v328
        %v371 = vmul.f32 %v328, %v370
        %vm372 = vcmp.eq.f32.partialorder %v328, inf
        %v373 = vsel %vm372, %v328, %v371
        %vm374 = vcmp.eq.f32.partialorder %v328, 0.0
        %v375 = vand.u32 %v328, 2147483648
        %v376 = vsel %vm374, %v375, %v373
        %v377 = vrsqrt.pop %v331
        %v378 = vmul.f32 %v331, %v377
        %vm379 = vcmp.eq.f32.partialorder %v331, inf
        %v380 = vsel %vm379, %v331, %v378
        %vm381 = vcmp.eq.f32.partialorder %v331, 0.0
        %v382 = vand.u32 %v331, 2147483648
        %v383 = vsel %vm381, %v382, %v380
        %v384 = vrsqrt.pop %v334
        %v385 = vmul.f32 %v334, %v384
        %vm386 = vcmp.eq.f32.partialorder %v334, inf
        %v387 = vsel %vm386, %v334, %v385
        %vm388 = vcmp.eq.f32.partialorder %v334, 0.0
        %v389 = vand.u32 %v334, 2147483648
        %v390 = vsel %vm388, %v389, %v387
        %v391 = vadd.f32 %v341, 0.0001
        %v392 = vadd.f32 %v348, 0.0001
        %v393 = vadd.f32 %v355, 0.0001
        %v394 = vadd.f32 %v362, 0.0001
        %v395 = vadd.f32 %v369, 0.0001
        %v396 = vadd.f32 %v376, 0.0001
        %v397 = vadd.f32 %v383, 0.0001
        %v398 = vadd.f32 %v390, 0.0001
        %v399 = vrcp.pop %v391
        %v400 = vrcp.pop %v392
        %v401 = vrcp.pop %v393
        %v402 = vrcp.pop %v394
        %v403 = vrcp.pop %v395
        %v404 = vrcp.pop %v396
        %v405 = vrcp.pop %v397
        %v406 = vrcp.pop %v398
        %v407 = vmul.f32 %v399, 10.0
        %v408 = vmul.f32 %v400, 10.0
        %v409 = vmul.f32 %v401, 10.0
        %v410 = vmul.f32 %v402, 10.0
        %v411 = vmul.f32 %v403, 10.0
        %v412 = vmul.f32 %v404, 10.0
        %v413 = vmul.f32 %v405, 10.0
        %v414 = vmul.f32 %v406, 10.0
        %v416 = vsel %vm310, %v284, 0
        %v419 = vsel %vm310, %v285, 0
        %v422 = vsel %vm310, %v286, 0
        %v425 = vsel %vm310, %v287, 0
        %v428 = vsel %vm310, %v288, 0
        %v431 = vsel %vm310, %v289, 0
        %v434 = vsel %vm310, %v290, 0
        %v437 = vsel %vm310, %v291, 0
        %vm439 = vcmask 1043456
        %v441 = vsel %vm439, %v300, 0
        %v444 = vsel %vm439, %v301, 0
        %446 = vmatprep.subr.mxu0 0.0
        %447 = vmatpush1.msra.mxu0 0.0
        %448 = vmatprep.subr.mxu0 0.0
        %449 = vmatpush1.msra.mxu0 0.0
        %450 = vmatprep.subr.mxu0 0.0
        %451 = vmatpush1.msra.mxu0 0.0
        %452 = vmatprep.subr.mxu0 0.0
        %453 = vmatpush1.msra.mxu0 0.0
        %454 = vmatprep.subr.mxu0 0.0
        %455 = vmatpush1.msra.mxu0 0.0
        %456 = vmatprep.subr.mxu0 0.0
        %457 = vmatpush1.msra.mxu0 0.0
        %458 = vmatprep.subr.mxu0 0.0
        %459 = vmatpush1.msra.mxu0 0.0
        %460 = vmatprep.subr.mxu0 0.0
        %461 = vmatpush1.msra.mxu0 0.0
        %462 = vmatprep.subr.mxu0 0.0
        %463 = vmatpush1.msra.mxu0 0.0
        %464 = vmatprep.subr.mxu0 0.0
        %465 = vmatpush1.msra.mxu0 0.0
        %466 = vmatprep.subr.mxu0 0.0
        %467 = vmatpush1.msra.mxu0 0.0
        %468 = vmatprep.subr.mxu0 %v444
        %469 = vmatpush1.msra.mxu0 %v441
        %470 = vmatprep.subr.mxu0 %v299
        %471 = vmatpush1.msra.mxu0 %v298
        %472 = vmatprep.subr.mxu0 %v297
        %473 = vmatpush1.msra.mxu0 %v296
        %474 = vmatprep.subr.mxu0 %v295
        %475 = vmatpush1.msra.mxu0 %v294
        %476 = vmatprep.subr.mxu0 %v293
        %477 = vmatpush1.msra.mxu0 %v292
        %478 = vmatprep.subr.mxu0 0.0
        %479 = vmatpush2.msra.mxu0 0.0
        %480 = vmatprep.subr.mxu0 0.0
        %481 = vmatpush2.msra.mxu0 0.0
        %482 = vmatprep.subr.mxu0 0.0
        %483 = vmatpush2.msra.mxu0 0.0
        %484 = vmatprep.subr.mxu0 0.0
        %485 = vmatpush2.msra.mxu0 0.0
        %486 = vmatprep.subr.mxu0 0.0
        %487 = vmatpush2.msra.mxu0 0.0
        %488 = vmatprep.subr.mxu0 0.0
        %489 = vmatpush2.msra.mxu0 0.0
        %490 = vmatprep.subr.mxu0 0.0
        %491 = vmatpush2.msra.mxu0 0.0
        %492 = vmatprep.subr.mxu0 0.0
        %493 = vmatpush2.msra.mxu0 0.0
        %494 = vmatprep.subr.mxu0 0.0
        %495 = vmatpush2.msra.mxu0 0.0
        %496 = vmatprep.subr.mxu0 0.0
        %497 = vmatpush2.msra.mxu0 0.0
        %498 = vmatprep.subr.mxu0 0.0
        %499 = vmatpush2.msra.mxu0 0.0
        %500 = vmatprep.subr.mxu0 0.0
        %501 = vmatpush2.msra.mxu0 0.0
        %502 = vmatprep.subr.mxu0 0.0
        %503 = vmatpush2.msra.mxu0 0.0
        %504 = vmatprep.subr.mxu0 0.0
        %505 = vmatpush2.msra.mxu0 0.0
        %506 = vmatprep.subr.mxu0 0.0
        %507 = vmatpush2.msra.mxu0 0.0
        %508 = vmatprep.subr.mxu0 0.0
        %509 = vmatpush2.msra.mxu0 0.0
        %510 = vmatprep.mubr.f32.mxu0 0.0
        %511 = vmatmul.mubr.f32.gmra.mxu0 %v416
        %v512 = vpop.f32.mrf.mxu0
        %v513 = vadd.f32 0.0, %v512
        %v514 = vpop.f32.mrf.mxu0
        %v515 = vadd.f32 0.0, %v514
        %516 = vmatprep.mubr.f32.mxu0 0.0
        %517 = vmatmul.mubr.f32.gmra.mxu0 %v419
        %v518 = vpop.f32.mrf.mxu0
        %v519 = vadd.f32 0.0, %v518
        %v520 = vpop.f32.mrf.mxu0
        %v521 = vadd.f32 0.0, %v520
        %522 = vmatprep.mubr.f32.mxu0 0.0
        %523 = vmatmul.mubr.f32.gmra.mxu0 %v422
        %v524 = vpop.f32.mrf.mxu0
        %v525 = vadd.f32 0.0, %v524
        %v526 = vpop.f32.mrf.mxu0
        %v527 = vadd.f32 0.0, %v526
        %528 = vmatprep.mubr.f32.mxu0 0.0
        %529 = vmatmul.mubr.f32.gmra.mxu0 %v425
        %v530 = vpop.f32.mrf.mxu0
        %v531 = vadd.f32 0.0, %v530
        %v532 = vpop.f32.mrf.mxu0
        %v533 = vadd.f32 0.0, %v532
        %534 = vmatprep.mubr.f32.mxu0 0.0
        %535 = vmatmul.mubr.f32.gmra.mxu0 %v428
        %v536 = vpop.f32.mrf.mxu0
        %v537 = vadd.f32 0.0, %v536
        %v538 = vpop.f32.mrf.mxu0
        %v539 = vadd.f32 0.0, %v538
        %540 = vmatprep.mubr.f32.mxu0 0.0
        %541 = vmatmul.mubr.f32.gmra.mxu0 %v431
        %v542 = vpop.f32.mrf.mxu0
        %v543 = vadd.f32 0.0, %v542
        %v544 = vpop.f32.mrf.mxu0
        %v545 = vadd.f32 0.0, %v544
        %546 = vmatprep.mubr.f32.mxu0 0.0
        %547 = vmatmul.mubr.f32.gmra.mxu0 %v434
        %v548 = vpop.f32.mrf.mxu0
        %v549 = vadd.f32 0.0, %v548
        %v550 = vpop.f32.mrf.mxu0
        %v551 = vadd.f32 0.0, %v550
        %552 = vmatprep.mubr.f32.mxu0 0.0
        %553 = vmatmul.mubr.f32.gmra.mxu0 %v437
        %v554 = vpop.f32.mrf.mxu0
        %v555 = vadd.f32 0.0, %v554
        %v556 = vpop.f32.mrf.mxu0
        %v557 = vadd.f32 0.0, %v556
        %558 = vdwg.mxu0
        %v559 = vmul.f32 %v513, %v407
        %v560 = vmul.f32 %v515, %v407
        %v561 = vmul.f32 %v519, %v408
        %v562 = vmul.f32 %v521, %v408
        %v563 = vmul.f32 %v525, %v409
        %v564 = vmul.f32 %v527, %v409
        %v565 = vmul.f32 %v531, %v410
        %v566 = vmul.f32 %v533, %v410
        %v567 = vmul.f32 %v537, %v411
        %v568 = vmul.f32 %v539, %v411
        %v569 = vmul.f32 %v543, %v412
        %v570 = vmul.f32 %v545, %v412
        %v571 = vmul.f32 %v549, %v413
        %v572 = vmul.f32 %v551, %v413
        %v573 = vmul.f32 %v555, %v414
        %v574 = vmul.f32 %v557, %v414
        %v575 = vmax.f32 %v559, %v563
        %v576 = vmax.f32 %v561, %v565
        %v577 = vmax.f32 %v575, %v567
        %v578 = vmax.f32 %v576, %v569
        %v579 = vmax.f32 %v577, %v571
        %v580 = vmax.f32 %v578, %v573
        %v581 = vmax.f32 %v579, %v580
        %v582 = vrot.slane %v581, 4
        %v583 = vmax.f32 %v581, %v582
        %v584 = vrot.slane %v583, 2
        %v585 = vmax.f32 %v583, %v584
        %v586 = vrot.slane %v585, 1
        %v587 = vmax.f32 %v585, %v586
        %v588 = vmax.f32 %v560, %v564
        %v589 = vmax.f32 %v562, %v566
        %v590 = vmax.f32 %v588, %v568
        %v591 = vmax.f32 %v589, %v570
        %v592 = vmax.f32 %v590, %v572
        %v593 = vmax.f32 %v591, %v574
        %v594 = vmax.f32 %v592, %v593
        %v595 = vrot.slane %v594, 4
        %v596 = vmax.f32 %v594, %v595
        %v597 = vrot.slane %v596, 2
        %v598 = vmax.f32 %v596, %v597
        %v599 = vrot.slane %v598, 1
        %v600 = vmax.f32 %v598, %v599
        %v601 = vsub.f32 %v559, %v587
        %v602 = vsub.f32 %v560, %v600
        %v603 = vsub.f32 %v561, %v587
        %v604 = vsub.f32 %v562, %v600
        %v605 = vsub.f32 %v563, %v587
        %v606 = vsub.f32 %v564, %v600
        %v607 = vsub.f32 %v565, %v587
        %v608 = vsub.f32 %v566, %v600
        %v609 = vsub.f32 %v567, %v587
        %v610 = vsub.f32 %v568, %v600
        %v611 = vsub.f32 %v569, %v587
        %v612 = vsub.f32 %v570, %v600
        %v613 = vsub.f32 %v571, %v587
        %v614 = vsub.f32 %v572, %v600
        %v615 = vsub.f32 %v573, %v587
        %v616 = vsub.f32 %v574, %v600
        %v617 = vmul.f32 %v601, 1.442695
        %v618 = vpow.pop %v617
        %v619 = vmul.f32 %v602, 1.442695
        %v620 = vpow.pop %v619
        %v621 = vmul.f32 %v603, 1.442695
        %v622 = vpow.pop %v621
        %v623 = vmul.f32 %v604, 1.442695
        %v624 = vpow.pop %v623
        %v625 = vmul.f32 %v605, 1.442695
        %v626 = vpow.pop %v625
        %v627 = vmul.f32 %v606, 1.442695
        %v628 = vpow.pop %v627
        %v629 = vmul.f32 %v607, 1.442695
        %v630 = vpow.pop %v629
        %v631 = vmul.f32 %v608, 1.442695
        %v632 = vpow.pop %v631
        %v633 = vmul.f32 %v609, 1.442695
        %v634 = vpow.pop %v633
        %v635 = vmul.f32 %v610, 1.442695
        %v636 = vpow.pop %v635
        %v637 = vmul.f32 %v611, 1.442695
        %v638 = vpow.pop %v637
        %v639 = vmul.f32 %v612, 1.442695
        %v640 = vpow.pop %v639
        %v641 = vmul.f32 %v613, 1.442695
        %v642 = vpow.pop %v641
        %v643 = vmul.f32 %v614, 1.442695
        %v644 = vpow.pop %v643
        %v645 = vmul.f32 %v615, 1.442695
        %v646 = vpow.pop %v645
        %v647 = vmul.f32 %v616, 1.442695
        %v648 = vpow.pop %v647
        %v649 = vadd.f32 %v618, %v622
        %v650 = vadd.f32 %v649, %v626
        %v651 = vadd.f32 %v650, %v630
        %v652 = vadd.f32 %v651, %v634
        %v653 = vadd.f32 %v652, %v638
        %v654 = vadd.f32 %v653, %v642
        %v655 = vadd.f32 %v654, %v646
        %v656 = vrot.slane %v655, 4
        %v657 = vadd.f32 %v655, %v656
        %v658 = vrot.slane %v657, 2
        %v659 = vadd.f32 %v657, %v658
        %v660 = vrot.slane %v659, 1
        %v661 = vadd.f32 %v659, %v660
        %v662 = vadd.f32 %v620, %v624
        %v663 = vadd.f32 %v662, %v628
        %v664 = vadd.f32 %v663, %v632
        %v665 = vadd.f32 %v664, %v636
        %v666 = vadd.f32 %v665, %v640
        %v667 = vadd.f32 %v666, %v644
        %v668 = vadd.f32 %v667, %v648
        %v669 = vrot.slane %v668, 4
        %v670 = vadd.f32 %v668, %v669
        %v671 = vrot.slane %v670, 2
        %v672 = vadd.f32 %v670, %v671
        %v673 = vrot.slane %v672, 1
        %v674 = vadd.f32 %v672, %v673
        %v675 = vrcp.pop %v661
        %v676 = vrcp.pop %v674
        %v677 = vmul.f32 %v618, %v675
        %v678 = vmul.f32 %v620, %v676
        %v679 = vmul.f32 %v622, %v675
        %v680 = vmul.f32 %v624, %v676
        %v681 = vmul.f32 %v626, %v675
        %v682 = vmul.f32 %v628, %v676
        %v683 = vmul.f32 %v630, %v675
        %v684 = vmul.f32 %v632, %v676
        %v685 = vmul.f32 %v634, %v675
        %v686 = vmul.f32 %v636, %v676
        %v687 = vmul.f32 %v638, %v675
        %v688 = vmul.f32 %v640, %v676
        %v689 = vmul.f32 %v642, %v675
        %v690 = vmul.f32 %v644, %v676
        %v691 = vmul.f32 %v646, %v675
        %v692 = vmul.f32 %v648, %v676
        %v693 = vld [vmem:[%s277] sm:$0xf]
        %v694 = vld [vmem:[%s277 + $0x4] sm:$0xf]
        %v695 = vld [vmem:[%s277 + $0x8] sm:$0xf]
        %v696 = vld [vmem:[%s277 + $0xc] sm:$0xf]
        %v697 = vld [vmem:[%s277 + $0x10] sm:$0xf]
        %v698 = vld [vmem:[%s277 + $0x14] sm:$0xf]
        %v699 = vld [vmem:[%s277 + $0x18] sm:$0xf]
        %v700 = vld [vmem:[%s277 + $0x1c] sm:$0xf]
        %v701 = vld [vmem:[%s277 + $0x20] sm:$0xf]
        %v702 = vpack.c.bf16 %v679, %v677
        %v703 = vpack.c.bf16 %v680, %v678
        %v704 = vpack.c.bf16 %v683, %v681
        %v705 = vpack.c.bf16 %v684, %v682
        %v706 = vpack.c.bf16 %v687, %v685
        %v707 = vpack.c.bf16 %v688, %v686
        %v708 = vpack.c.bf16 %v691, %v689
        %v709 = vpack.c.bf16 %v692, %v690
        %v719 = vunpack.c.l.b16 %v693
        %v720 = vunpack.c.l.b16 %v694
        %v721 = vunpack.c.l.b16 %v695
        %v722 = vunpack.c.l.b16 %v696
        %v723 = vunpack.c.l.b16 %v697
        %v724 = vunpack.c.l.b16 %v698
        %v725 = vunpack.c.l.b16 %v699
        %v726 = vunpack.c.l.b16 %v700
        %v727 = vunpack.c.l.b16 %v701
        %v728 = vpack.c.b16 %v720, %v719
        %v729 = vpack.c.b16 %v722, %v721
        %v730 = vpack.c.b16 %v724, %v723
        %v731 = vpack.c.b16 %v726, %v725
        %v732 = vpack.c.b16 %v727, %v727
        %vm733 = vcmask 523264
        %v735 = vsel %vm733, %v728, 0
        %v738 = vsel %vm733, %v729, 0
        %v741 = vsel %vm733, %v730, 0
        %v744 = vsel %vm733, %v731, 0
        %v747 = vsel %vm733, %v732, 0
        %749 = vmatprep.subr.bf16.mxu0 0
        %750 = vmatpush1.bf16.msra.mxu0 0
        %751 = vmatprep.subr.bf16.mxu0 0
        %752 = vmatpush1.bf16.msra.mxu0 0
        %753 = vmatprep.subr.bf16.mxu0 0
        %754 = vmatpush1.bf16.msra.mxu0 0
        %755 = vmatprep.subr.bf16.mxu0 0
        %756 = vmatpush1.bf16.msra.mxu0 0
        %757 = vmatprep.subr.bf16.mxu0 %v709
        %758 = vmatpush1.bf16.msra.mxu0 %v708
        %759 = vmatprep.subr.bf16.mxu0 %v707
        %760 = vmatpush1.bf16.msra.mxu0 %v706
        %761 = vmatprep.subr.bf16.mxu0 %v705
        %762 = vmatpush1.bf16.msra.mxu0 %v704
        %763 = vmatprep.subr.bf16.mxu0 %v703
        %764 = vmatpush1.bf16.msra.mxu0 %v702
        %765 = vmatprep.subr.bf16.mxu0 0
        %766 = vmatpush2.bf16.msra.mxu0 0
        %767 = vmatprep.subr.bf16.mxu0 0
        %768 = vmatpush2.bf16.msra.mxu0 0
        %769 = vmatprep.subr.bf16.mxu0 0
        %770 = vmatpush2.bf16.msra.mxu0 0
        %771 = vmatprep.subr.bf16.mxu0 0
        %772 = vmatpush2.bf16.msra.mxu0 0
        %773 = vmatprep.subr.bf16.mxu0 0
        %774 = vmatpush2.bf16.msra.mxu0 0
        %775 = vmatprep.subr.bf16.mxu0 0
        %776 = vmatpush2.bf16.msra.mxu0 0
        %777 = vmatprep.subr.bf16.mxu0 0
        %778 = vmatpush2.bf16.msra.mxu0 0
        %779 = vmatprep.subr.bf16.mxu0 0
        %780 = vmatpush2.bf16.msra.mxu0 0
        %781 = vmatprep.mubr.bf16.mxu0 0
        %782 = vmatmul.mubr.bf16.gmra.mxu0 %v735
        %v783 = vpop.f32.mrf.mxu0
        %v784 = vadd.f32 0.0, %v783
        %v785 = vpop.f32.mrf.mxu0
        %v786 = vadd.f32 0.0, %v785
        %v787 = vpop.f32.mrf.mxu0
        %v788 = vadd.f32 0.0, %v787
        %v789 = vpop.f32.mrf.mxu0
        %v790 = vadd.f32 0.0, %v789
        %791 = vmatprep.mubr.bf16.mxu0 0
        %792 = vmatmul.mubr.bf16.gmra.mxu0 %v738
        %v793 = vpop.f32.mrf.mxu0
        %v794 = vadd.f32 0.0, %v793
        %v795 = vpop.f32.mrf.mxu0
        %v796 = vadd.f32 0.0, %v795
        %v797 = vpop.f32.mrf.mxu0
        %v798 = vadd.f32 0.0, %v797
        %v799 = vpop.f32.mrf.mxu0
        %v800 = vadd.f32 0.0, %v799
        %801 = vmatprep.mubr.bf16.mxu0 0
        %802 = vmatmul.mubr.bf16.gmra.mxu0 %v741
        %v803 = vpop.f32.mrf.mxu0
        %v804 = vadd.f32 0.0, %v803
        %v805 = vpop.f32.mrf.mxu0
        %v806 = vadd.f32 0.0, %v805
        %v807 = vpop.f32.mrf.mxu0
        %v808 = vadd.f32 0.0, %v807
        %v809 = vpop.f32.mrf.mxu0
        %v810 = vadd.f32 0.0, %v809
        %811 = vmatprep.mubr.bf16.mxu0 0
        %812 = vmatmul.mubr.bf16.gmra.mxu0 %v744
        %v813 = vpop.f32.mrf.mxu0
        %v814 = vadd.f32 0.0, %v813
        %v815 = vpop.f32.mrf.mxu0
        %v816 = vadd.f32 0.0, %v815
        %v817 = vpop.f32.mrf.mxu0
        %v818 = vadd.f32 0.0, %v817
        %v819 = vpop.f32.mrf.mxu0
        %v820 = vadd.f32 0.0, %v819
        %821 = vmatprep.mubr.bf16.mxu0 0
        %822 = vmatmul.mubr.bf16.gmra.mxu0 %v747
        %v823 = vpop.f32.mrf.mxu0
        %v824 = vadd.f32 0.0, %v823
        %v825 = vpop.f32.mrf.mxu0
        %v826 = vadd.f32 0.0, %v825
        %v827 = vpop.f32.mrf.mxu0
        %v828 = vpop.f32.mrf.mxu0
        %829 = vdwg.mxu0
        %v830 = vld [vmem:[%s3] sm:$0xff]
        %v831 = vld [vmem:[%s3 + $0x8] sm:$0xff]
        %v832 = vld [vmem:[%s3 + $0x10] sm:$0x1]
        %v833 = vld [vmem:[%s3 + $0x18] sm:$0x1]
        %834 = vrot.lane.b32.xlu0 %v784, 17
        %v835 = vpop.permute.xlu0 %834
        %836 = vrot.lane.b32.xlu0 %v786, 17
        %v837 = vpop.permute.xlu0 %836
        %v838 = vlaneseq
        %v839 = vand.u32 %v838, 127
        %vm840 = vcmp.lt.s32.totalorder %v839, 17
        %v841 = vsel %vm840, %v835, %v837
        %v842 = vsel %vm840, %v837, %v835
        %v843 = vlaneseq
        %v844 = vshrl.u32 %v843, 7
        %v845 = vsub.s32 0, %v844
        %v846 = vrot.slane %v830, %v845
        %v847 = vlaneseq
        %v848 = vshrl.u32 %v847, 7
        %v849 = vsub.s32 0, %v848
        %v850 = vrot.slane %v831, %v849
        %v851 = vmul.f32 %v842, %v846
        %v852 = vmul.f32 %v841, %v850
        %v853 = vadd.f32 %v851, 0.0
        %v854 = vadd.f32 %v852, 0.0
        %855 = vrot.lane.b32.xlu0 %v788, 16
        %v856 = vpop.permute.xlu0 %855
        %857 = vrot.lane.b32.xlu0 %v790, 16
        %v858 = vpop.permute.xlu0 %857
        %vm859 = vcmp.lt.s32.totalorder %v839, 16
        %v860 = vsel %vm859, %v856, %v858
        %v861 = vsel %vm859, %v858, %v856
        %v862 = vlaneseq
        %v863 = vshrl.u32 %v862, 7
        %v864 = vsub.s32 1, %v863
        %v865 = vrot.slane %v830, %v864
        %v866 = vlaneseq
        %v867 = vshrl.u32 %v866, 7
        %v868 = vsub.s32 1, %v867
        %v869 = vrot.slane %v831, %v868
        %v870 = vmul.f32 %v861, %v865
        %v871 = vmul.f32 %v860, %v869
        %v872 = vadd.f32 %v853, %v870
        %v873 = vadd.f32 %v854, %v871
        %874 = vrot.lane.b32.xlu0 %v794, 15
        %v875 = vpop.permute.xlu0 %874
        %876 = vrot.lane.b32.xlu0 %v796, 15
        %v877 = vpop.permute.xlu0 %876
        %vm878 = vcmp.lt.s32.totalorder %v839, 15
        %v879 = vsel %vm878, %v875, %v877
        %v880 = vsel %vm878, %v877, %v875
        %v881 = vlaneseq
        %v882 = vshrl.u32 %v881, 7
        %v883 = vsub.s32 2, %v882
        %v884 = vrot.slane %v830, %v883
        %v885 = vlaneseq
        %v886 = vshrl.u32 %v885, 7
        %v887 = vsub.s32 2, %v886
        %v888 = vrot.slane %v831, %v887
        %v889 = vmul.f32 %v880, %v884
        %v890 = vmul.f32 %v879, %v888
        %v891 = vadd.f32 %v872, %v889
        %v892 = vadd.f32 %v873, %v890
        %893 = vrot.lane.b32.xlu0 %v798, 1
        %v894 = vpop.permute.xlu0 %893
        %895 = vrot.lane.b32.xlu0 %v800, 1
        %v896 = vpop.permute.xlu0 %895
        %vm897 = vcmp.lt.s32.totalorder %v839, 1
        %v898 = vsel %vm897, %v894, %v896
        %v899 = vsel %vm897, %v896, %v894
        %v900 = vlaneseq
        %v901 = vshrl.u32 %v900, 7
        %v902 = vsub.s32 3, %v901
        %v903 = vrot.slane %v830, %v902
        %v904 = vlaneseq
        %v905 = vshrl.u32 %v904, 7
        %v906 = vsub.s32 3, %v905
        %v907 = vrot.slane %v831, %v906
        %v908 = vmul.f32 %v899, %v903
        %v909 = vmul.f32 %v898, %v907
        %v910 = vadd.f32 %v891, %v908
        %v911 = vadd.f32 %v892, %v909
        %v912 = vlaneseq
        %v913 = vshrl.u32 %v912, 7
        %v914 = vsub.s32 4, %v913
        %v915 = vrot.slane %v830, %v914
        %v916 = vlaneseq
        %v917 = vshrl.u32 %v916, 7
        %v918 = vsub.s32 4, %v917
        %v919 = vrot.slane %v831, %v918
        %v920 = vmul.f32 %v804, %v915
        %v921 = vmul.f32 %v806, %v919
        %v922 = vadd.f32 %v910, %v920
        %v923 = vadd.f32 %v911, %v921
        %924 = vrot.lane.b32.xlu0 %v808, 127
        %v925 = vpop.permute.xlu0 %924
        %926 = vrot.lane.b32.xlu0 %v810, 127
        %v927 = vpop.permute.xlu0 %926
        %vm928 = vcmp.lt.s32.totalorder %v839, 127
        %v929 = vsel %vm928, %v925, %v927
        %v930 = vsel %vm928, %v927, %v925
        %v931 = vlaneseq
        %v932 = vshrl.u32 %v931, 7
        %v933 = vsub.s32 5, %v932
        %v934 = vrot.slane %v830, %v933
        %v935 = vlaneseq
        %v936 = vshrl.u32 %v935, 7
        %v937 = vsub.s32 5, %v936
        %v938 = vrot.slane %v831, %v937
        %v939 = vmul.f32 %v929, %v934
        %v940 = vmul.f32 %v930, %v938
        %v941 = vadd.f32 %v922, %v939
        %v942 = vadd.f32 %v923, %v940
        %943 = vrot.lane.b32.xlu0 %v814, 113
        %v944 = vpop.permute.xlu0 %943
        %945 = vrot.lane.b32.xlu0 %v816, 113
        %v946 = vpop.permute.xlu0 %945
        %vm947 = vcmp.lt.s32.totalorder %v839, 113
        %v948 = vsel %vm947, %v944, %v946
        %v949 = vsel %vm947, %v946, %v944
        %v950 = vlaneseq
        %v951 = vshrl.u32 %v950, 7
        %v952 = vsub.s32 6, %v951
        %v953 = vrot.slane %v830, %v952
        %v954 = vlaneseq
        %v955 = vshrl.u32 %v954, 7
        %v956 = vsub.s32 6, %v955
        %v957 = vrot.slane %v831, %v956
        %v958 = vmul.f32 %v948, %v953
        %v959 = vmul.f32 %v949, %v957
        %v960 = vadd.f32 %v941, %v958
        %v961 = vadd.f32 %v942, %v959
        %962 = vrot.lane.b32.xlu0 %v818, 112
        %v963 = vpop.permute.xlu0 %962
        %964 = vrot.lane.b32.xlu0 %v820, 112
        %v965 = vpop.permute.xlu0 %964
        %vm966 = vcmp.lt.s32.totalorder %v839, 112
        %v967 = vsel %vm966, %v963, %v965
        %v968 = vsel %vm966, %v965, %v963
        %v969 = vlaneseq
        %v970 = vshrl.u32 %v969, 7
        %v971 = vsub.s32 7, %v970
        %v972 = vrot.slane %v830, %v971
        %v973 = vlaneseq
        %v974 = vshrl.u32 %v973, 7
        %v975 = vsub.s32 7, %v974
        %v976 = vrot.slane %v831, %v975
        %v977 = vmul.f32 %v967, %v972
        %v978 = vmul.f32 %v968, %v976
        %v979 = vadd.f32 %v960, %v977
        %v980 = vadd.f32 %v961, %v978
        %981 = vrot.lane.b32.xlu0 %v824, 111
        %v982 = vpop.permute.xlu0 %981
        %983 = vrot.lane.b32.xlu0 %v826, 111
        %v984 = vpop.permute.xlu0 %983
        %vm985 = vcmp.lt.s32.totalorder %v839, 111
        %v986 = vsel %vm985, %v982, %v984
        %v987 = vsel %vm985, %v984, %v982
        %v988 = vlaneseq
        %v989 = vshrl.u32 %v988, 7
        %v990 = vsub.s32 0, %v989
        %v991 = vrot.slane %v832, %v990
        %v992 = vlaneseq
        %v993 = vshrl.u32 %v992, 7
        %v994 = vsub.s32 0, %v993
        %v995 = vrot.slane %v833, %v994
        %v996 = vmul.f32 %v986, %v991
        %v997 = vmul.f32 %v987, %v995
        %v998 = vadd.f32 %v979, %v996
        %v999 = vadd.f32 %v980, %v997
        %v1000 = vld [vmem:[%s282] sm:$0xff]
        %v1001 = vld [vmem:[%s282 + $0x8] sm:$0xff]
        %v1002 = vadd.f32 %v998, %v1000
        %v1003 = vadd.f32 %v999, %v1001
        %1004 = vst [vmem:[%s262] sm:$0xff] %v1002
        %1005 = vst [vmem:[%s262 + $0x8] sm:$0xff] %v1003
        %s1006 = sand.u32 %s152, 1
        %s1007 = scalar_lea.sflag [#allocation3], %s1006
        %s1008 = sand.u32 %s152, 1
        %s1009 = smul.addr %s1008, 16
        %s1010 = scalar_lea.vmem [#allocation2], %s1009
        // Predicated region
        $region41: #{tpu_custom_call.1} parent=39 // pred_check
          %p1011 = pneg %p162
        $region42: #{tpu_custom_call.1} parent=39 // pred_check_branch
          %1013 = sbr.rel (%p1011) target = $region44
        $region43: #{tpu_custom_call.1} parent=39 // pred_region
          %s1015 = ssub.s32 256, 256
          %1016 = vsyncadd %s1007, %s1015
          %s1017 = smul.addr %s19, 2
          %s1018 = smul.addr %s1017, 128
          %s1019 = scalar_lea.hbm %s5, %s1018
          %s1021 = sshll.u32 %s1010, 4
          %s1022 = int_to_ptr.vmem [resolvable:$true] %s1021
          %1024 = dma.vmem_to_hbm [thread:$0]  %s1022, 256, %s1019, %s1007
        $region44: #{tpu_custom_call.1} parent=39 // pred_fallthru
          _
      $region40: #{tpu_custom_call.1} parent=5 // pred_fallthru
        _
      %p1025 = scmp.le.s32.totalorder 2, %s14
      // Predicated region
      $region45: #{tpu_custom_call.1} parent=5 // pred_check
        %p1026 = pneg %p1025
      $region46: #{tpu_custom_call.1} parent=5 // pred_check_branch
        %1028 = sbr.rel (%p1026) target = $region48
      $region47: #{tpu_custom_call.1} parent=5 // pred_region
        %s1029 = ssub.s32 %s14, 2
        // Predicated region
        $region49: #{tpu_custom_call.1} parent=47 // pred_check
          %p1030 = pneg %p168
        $region50: #{tpu_custom_call.1} parent=47 // pred_check_branch
          %1032 = sbr.rel (%p1030) target = $region52
        $region51: #{tpu_custom_call.1} parent=47 // pred_region
          %s1033 = sand.u32 %s153, 1
          %s1034 = scalar_lea.sflag [#allocation3], %s1033
          %s1035 = sand.u32 %s153, 1
          %s1036 = smul.addr %s1035, 16
          %s1037 = scalar_lea.vmem [#allocation2], %s1036
          %1038 = dma.done %s1034, 256
        $region52: #{tpu_custom_call.1} parent=47 // pred_fallthru
          _
      $region48: #{tpu_custom_call.1} parent=5 // pred_fallthru
        _
    $region6: #{tpu_custom_call.1} parent=1 // loop_footer
      %s18 = sadd.s32 1, %s14
    $region7: #{tpu_custom_call.1} parent=1 // loop_footer_branch
      %13 = sbr.rel target = $region3
    $region8: #{tpu_custom_call.1} parent=1 // loop_exit
      _
    %1039 = vsyncpa [#allocation3], 1
    %s1040 = scalar_lea.sflag [#allocation3], 1
    %1041 = vsyncpa %s1040, 1

</llo_original>
